<compile_context>
chip_gen: v6e
topology: v6e:2x2x1
jax: 0.10.0
libtpu: 0.0.40
codegen_flags: <defaults>
</compile_context>

<pallas_src>
import functools

import numpy as np
import jax
import jax.numpy as jnp
from jax.experimental import pallas as pl
from jax.experimental.pallas import tpu as pltpu


def _round_up(x, m):
    return ((x + m - 1) // m) * m


def _periodic_loss_kernel(x_ref, basis_ref, psd_ref, band_ref, sparse_ref, *,
                          K_pad, left, right, dbins):
    i = pl.program_id(1)   # "arbitrary" batch-step axis (axis 0 is the parallel group)

    @pl.when(i == 0)
    def _init():
        psd_ref[...] = jnp.zeros_like(psd_ref)
        band_ref[...] = jnp.zeros_like(band_ref)
        sparse_ref[...] = jnp.zeros_like(sparse_ref)

    x = x_ref[...]                                   # (TB, T) f32
    if x.dtype != basis_ref.dtype:
        x = x.astype(basis_ref.dtype)                # bf16 MXU fast path (v6e/v7x)
    # Fused DFT: one matmul; re | im split at a lane-aligned (128-multiple) boundary.
    spec = jnp.dot(x, basis_ref[...], preferred_element_type=jnp.float32)  # (TB, 2*K_pad)
    re = spec[:, :K_pad]
    im = spec[:, K_pad:]
    psd = re * re + im * im                          # (TB, K_pad); pad bins exactly 0

    kk = jax.lax.broadcasted_iota(jnp.int32, (1, K_pad), 1)   # one shared lane index row
    in_band = (kk >= left) & (kk < right)                      # (1, K_pad)

    total = jnp.sum(psd, axis=1, keepdims=True)                                   # (TB,1)
    in_band_sum = jnp.sum(jnp.where(in_band, psd, 0.0), axis=1, keepdims=True)    # (TB,1)
    out_band = total - in_band_sum                    # == sum(psd[:l]) + sum(psd[r:])
    band_rows = out_band * pl.reciprocal(total + 1e-8, approx=True)

    # peak = argmax(psd[left:right]) + left  (first-max convention, like torch.argmax)
    band_psd = jnp.where(in_band, psd, -jnp.inf)
    max_val = jnp.max(band_psd, axis=1, keepdims=True)
    peak = jnp.min(jnp.where(band_psd >= max_val, kk, K_pad), axis=1, keepdims=True)

    # sparse numerator = in-band sum minus the window [peak-d, peak+d) clipped to band
    lo = jnp.maximum(peak - dbins, left)
    hi = jnp.minimum(peak + dbins, right)
    center = jnp.sum(jnp.where((kk >= lo) & (kk < hi), psd, 0.0),
                     axis=1, keepdims=True)
    sparse_num = in_band_sum - center
    sparse_den = in_band_sum + (right - left) * 1e-8      # == sum(psd[l:r] + 1e-8)
    sparse_rows = sparse_num * pl.reciprocal(sparse_den, approx=True)

    # Accumulate per-group partials straight into the resident output blocks
    # (zero-padded batch rows contribute exactly 0 to every partial).
    psd_ref[...] += jnp.sum(psd, axis=0, keepdims=True)[None]                  # (1,1,K_pad)
    band_ref[...] += jnp.broadcast_to(jnp.sum(band_rows, keepdims=True), band_ref.shape)
    sparse_ref[...] += jnp.broadcast_to(jnp.sum(sparse_rows, keepdims=True),
                                        sparse_ref.shape)


def periodic_loss(preds, Fs, *, N=1024, delta=6.0, pulse_band=None, weights=None,
                  block_b=128, num_groups=2, basis_dtype=jnp.float32):
    """Pallas implementation of PeriodicLoss.forward(preds, Fs)."""
    if pulse_band is None:
        pulse_band = [40 / 60.0, 180 / 60.0]
    if weights is None:
        weights = [1.0, 1.0, 1.0]

    preds = jnp.asarray(preds, jnp.float32)
    B, T = preds.shape
    K = N // 2 + 1
    K_pad = _round_up(K, 128)

    # Static (Fs, N, band)-dependent scalars, computed host-side (glue).
    freq = np.linspace(0.0, Fs / 2.0, K, dtype=np.float32)
    left = int(np.argmin(np.abs(freq - pulse_band[0])))
    right = int(np.argmin(np.abs(freq - pulse_band[1])))
    if right <= left:
        raise ValueError("pulse_band maps to an empty frequency band")
    dbins = max(1, round((delta / 60.0) / (Fs / 2.0 / K)))

    # Fused, zero-padded DFT basis [cos | -sin] for rfft(x, n=N); shape (T, 2*K_pad).
    t = np.arange(T, dtype=np.float64)[:, None]
    k = np.arange(K, dtype=np.float64)[None, :]
    ang = 2.0 * np.pi * t * k / N
    basis_np = np.zeros((T, 2 * K_pad), dtype=np.float32)
    basis_np[:, :K] = np.cos(ang)
    basis_np[:, K_pad:K_pad + K] = -np.sin(ang)
    basis = jnp.asarray(basis_np, dtype=basis_dtype)

    # Batch tiling: TB rows per step (multiple of 8); G parallel groups x nb steps.
    TB = max(8, _round_up(min(int(block_b), _round_up(B, 8)), 8))
    n_blocks = -(-B // TB)
    G = max(1, min(int(num_groups), n_blocks))
    nb = -(-n_blocks // G)
    B_pad = G * nb * TB
    if B_pad != B:
        preds = jnp.pad(preds, ((0, B_pad - B), (0, 0)))   # zero rows contribute 0

    kernel = functools.partial(_periodic_loss_kernel, K_pad=K_pad, left=left,
                               right=right, dbins=dbins)

    # VMEM budget: resident basis + double-buffered preds tile + activations + outputs.
    est = (2 * (basis.size * basis.dtype.itemsize + TB * T * 4)
           + 10 * TB * K_pad * 4 + 4 * (K_pad + 2 * 128) * 4)
    vmem_limit = int(min(48 * 1024 * 1024, max(24 * 1024 * 1024, 2 * est)))

    psd_part, band_part, sparse_part = pl.pallas_call(
        kernel,
        out_shape=(jax.ShapeDtypeStruct((G, 1, K_pad), jnp.float32),
                   jax.ShapeDtypeStruct((G, 1, 128), jnp.float32),
                   jax.ShapeDtypeStruct((G, 1, 128), jnp.float32)),
        grid_spec=pltpu.PrefetchScalarGridSpec(
            num_scalar_prefetch=0,
            grid=(G, nb),
            in_specs=[
                pl.BlockSpec((TB, T), lambda g, i: (g * nb + i, 0)),       # streamed tile
                pl.BlockSpec((T, 2 * K_pad), lambda g, i: (0, 0)),         # resident basis
            ],
            out_specs=[
                pl.BlockSpec((1, 1, K_pad), lambda g, i: (g, 0, 0)),       # PSD partial
                pl.BlockSpec((1, 1, 128), lambda g, i: (g, 0, 0)),         # band partial
                pl.BlockSpec((1, 1, 128), lambda g, i: (g, 0, 0)),         # sparse partial
            ]),
        compiler_params=pltpu.CompilerParams(
            dimension_semantics=("parallel", "arbitrary"),
            vmem_limit_bytes=vmem_limit),
    )(preds, basis)

    # Tiny O(K) epilogue in plain JAX: combine per-core partials, cumulative
    # distribution Q, variance term, weighted sum.
    band_mean = jnp.sum(band_part[:, 0, 0]) / B
    sparse_mean = jnp.sum(sparse_part[:, 0, 0]) / B
    bp = jnp.sum(psd_part[:, 0, :K], axis=0)
    bp = bp / (1e-8 + jnp.sum(bp))
    Q = jnp.clip(jnp.cumsum(bp), 0.0, 1.0)
    P = jnp.linspace(0.0, 1.0, K, dtype=jnp.float32)   # Uniform(0, Fs/2).cdf(freq)
    variance = jnp.mean((P - Q) ** 2)
    return (weights[0] * band_mean + weights[1] * sparse_mean + weights[2] * variance)


def _reference(preds, Fs, *, N, delta=6.0, pulse_band=None, weights=None):
    """NumPy re-implementation with PyTorch semantics, for a sanity check."""
    if pulse_band is None:
        pulse_band = [40 / 60.0, 180 / 60.0]
    if weights is None:
        weights = [1.0, 1.0, 1.0]
    preds = np.asarray(preds, dtype=np.float32)
    B = preds.shape[0]
    K = N // 2 + 1
    freq = np.linspace(0.0, Fs / 2.0, K, dtype=np.float32)
    left = int(np.argmin(np.abs(freq - pulse_band[0])))
    right = int(np.argmin(np.abs(freq - pulse_band[1])))
    d = max(1, round((delta / 60.0) / (Fs / 2.0 / K)))
    band_losses, sparse_losses = [], []
    batch_psd = np.zeros(K, dtype=np.float64)
    for i in range(B):
        psd = np.abs(np.fft.rfft(preds[i], n=N)) ** 2
        batch_psd = batch_psd + psd
        band_losses.append((psd[:left].sum() + psd[right:].sum()) / (1e-8 + psd.sum()))
        peak = int(np.argmax(psd[left:right])) + left
        sparse_losses.append((psd[left:peak - d].sum() + psd[peak + d:right].sum())
                             / np.sum(psd[left:right] + 1e-8))
    batch_psd = batch_psd / (1e-8 + batch_psd.sum())
    Q = np.clip(np.cumsum(batch_psd), 0.0, 1.0)
    P = np.clip(freq / (Fs / 2.0), 0.0, 1.0)
    variance_loss = np.mean((P - Q) ** 2)
    return (weights[0] * np.mean(band_losses)
            + weights[1] * np.mean(sparse_losses)
            + weights[2] * variance_loss)


if __name__ == "__main__":
    key = jax.random.PRNGKey(0)
    B, T, N, Fs = 4, 64, 128, 30.0           # small shapes; K = N//2 + 1 = 65 -> K_pad = 128
    preds = jax.random.normal(key, (B, T), dtype=jnp.float32)

    # f32-basis path: validated against the NumPy/PyTorch-semantics reference.
    loss = jax.block_until_ready(periodic_loss(preds, Fs, N=N))
    ref = _reference(np.asarray(preds), Fs, N=N)
    assert np.isfinite(float(loss)), float(loss)
    assert abs(float(loss) - ref) <= 0.05 * max(1.0, abs(ref)), (float(loss), ref)

    # Multi-group (2-TensorCore-style) path: 24 rows, TB=8 -> grid (2, 2) with padded rows.
    preds2 = jax.random.normal(jax.random.PRNGKey(1), (24, T), dtype=jnp.float32)
    loss2 = jax.block_until_ready(
        periodic_loss(preds2, Fs, N=N, block_b=8, num_groups=2))
    ref2 = _reference(np.asarray(preds2), Fs, N=N)
    assert abs(float(loss2) - ref2) <= 0.05 * max(1.0, abs(ref2)), (float(loss2), ref2)

    # bf16-basis MXU fast path (v6e/v7x): exercise it and check it stays finite
    # (argmax near-ties can shift sparse_loss discretely, so only the f32 paths are
    #  compared against the reference).
    loss_bf16 = jax.block_until_ready(
        periodic_loss(preds, Fs, N=N, basis_dtype=jnp.bfloat16))
    assert np.isfinite(float(loss_bf16)), float(loss_bf16)

    print("KERNEL_OK")
</pallas_src>

<mosaic_0001>
module attributes {stable_mosaic.version = 11 : i64} {
  func.func @_periodic_loss_kernel(%arg0: i32, %arg1: i32, %arg2: memref<8x64xf32, #tpu.memory_space<vmem>>, %arg3: memref<64x256xf32, #tpu.memory_space<vmem>>, %arg4: memref<1x1x128xf32, #tpu.memory_space<vmem>>, %arg5: memref<1x1x128xf32, #tpu.memory_space<vmem>>, %arg6: memref<1x1x128xf32, #tpu.memory_space<vmem>>) attributes {dimension_semantics = [#tpu.dimension_semantics<parallel>, #tpu.dimension_semantics<arbitrary>], iteration_bounds = array<i64: 1, 1>, scalar_prefetch = 0 : i64, scratch_operands = 0 : i64, tpu.core_type = #tpu.core_type<tc>, window_params = [{transform_indices = @transform_0, window_bounds = array<i64: 8, 64>}, {pipeline_mode = #tpu.pipeline_mode<synchronous>, transform_indices = @transform_1, window_bounds = array<i64: 64, 256>}, {transform_indices = @transform_2, window_bounds = array<i64: 1, 1, 128>}, {transform_indices = @transform_3, window_bounds = array<i64: 1, 1, 128>}, {transform_indices = @transform_4, window_bounds = array<i64: 1, 1, 128>}]} {
    %c0_i32 = arith.constant 0 : i32
    %0 = arith.cmpi eq, %arg1, %c0_i32 : i32
    %1 = arith.extui %0 : i1 to i32
    %c0_i32_0 = arith.constant 0 : i32
    %2 = arith.cmpi ne, %1, %c0_i32_0 : i32
    scf.if %2 {
      %cst_38 = arith.constant 0.000000e+00 : f32
      %94 = vector.broadcast %cst_38 : f32 to vector<1x1x128xf32>
      %c0_39 = arith.constant 0 : index
      %c0_40 = arith.constant 0 : index
      %c0_41 = arith.constant 0 : index
      %95 = vector.load %arg4[%c0_39, %c0_40, %c0_41] : memref<1x1x128xf32, #tpu.memory_space<vmem>>, vector<1x1x128xf32>
      tpu.vector_store %arg4[%c0_39, %c0_40, %c0_41], %94 {strides = array<i32>} : memref<1x1x128xf32, #tpu.memory_space<vmem>>, vector<1x1x128xf32>,
      %cst_42 = arith.constant 0.000000e+00 : f32
      %96 = vector.broadcast %cst_42 : f32 to vector<1x1x128xf32>
      %c0_43 = arith.constant 0 : index
      %c0_44 = arith.constant 0 : index
      %c0_45 = arith.constant 0 : index
      %97 = vector.load %arg5[%c0_43, %c0_44, %c0_45] : memref<1x1x128xf32, #tpu.memory_space<vmem>>, vector<1x1x128xf32>
      tpu.vector_store %arg5[%c0_43, %c0_44, %c0_45], %96 {strides = array<i32>} : memref<1x1x128xf32, #tpu.memory_space<vmem>>, vector<1x1x128xf32>,
      %cst_46 = arith.constant 0.000000e+00 : f32
      %98 = vector.broadcast %cst_46 : f32 to vector<1x1x128xf32>
      %c0_47 = arith.constant 0 : index
      %c0_48 = arith.constant 0 : index
      %c0_49 = arith.constant 0 : index
      %99 = vector.load %arg6[%c0_47, %c0_48, %c0_49] : memref<1x1x128xf32, #tpu.memory_space<vmem>>, vector<1x1x128xf32>
      tpu.vector_store %arg6[%c0_47, %c0_48, %c0_49], %98 {strides = array<i32>} : memref<1x1x128xf32, #tpu.memory_space<vmem>>, vector<1x1x128xf32>,
    } else {
    }
    %c0 = arith.constant 0 : index
    %c0_1 = arith.constant 0 : index
    %3 = vector.load %arg2[%c0, %c0_1] : memref<8x64xf32, #tpu.memory_space<vmem>>, vector<8x64xf32>
    %c0_2 = arith.constant 0 : index
    %c0_3 = arith.constant 0 : index
    %4 = vector.load %arg3[%c0_2, %c0_3] : memref<64x256xf32, #tpu.memory_space<vmem>>, vector<64x256xf32>
    %cst = arith.constant dense<0.000000e+00> : vector<8x256xf32>
    %5 = tpu.matmul %3, %4, %cst {dimension_numbers = #tpu.dot_dimension_numbers<[1], [0], [0], [1], [0, 0, 1, 1], [], []>} : vector<8x64xf32>, vector<64x256xf32>, vector<8x256xf32> -> vector<8x256xf32>
    %6 = vector.extract_strided_slice %5 {offsets = [0, 0], sizes = [8, 128], strides = [1, 1]} : vector<8x256xf32> to vector<8x128xf32>
    %7 = vector.extract_strided_slice %5 {offsets = [0, 128], sizes = [8, 128], strides = [1, 1]} : vector<8x256xf32> to vector<8x128xf32>
    %8 = arith.mulf %6, %6 : vector<8x128xf32>
    %9 = arith.mulf %7, %7 : vector<8x128xf32>
    %10 = arith.addf %8, %9 : vector<8x128xf32>
    %11 = tpu.iota {dimensions = array<i32: 1>} : vector<1x128xi32>
    %c3_i32 = arith.constant 3 : i32
    %12 = vector.broadcast %c3_i32 : i32 to vector<1x128xi32>
    %13 = arith.cmpi sge, %11, %12 : vector<1x128xi32>
    %c13_i32 = arith.constant 13 : i32
    %14 = vector.broadcast %c13_i32 : i32 to vector<1x128xi32>
    %15 = arith.cmpi slt, %11, %14 : vector<1x128xi32>
    %16 = arith.andi %13, %15 : vector<1x128xi1>
    %cst_4 = arith.constant dense<0.000000e+00> : vector<8xf32>
    %17 = vector.multi_reduction <add>, %10, %cst_4 [1] : vector<8x128xf32> to vector<8xf32>
    %18 = vector.shape_cast %17 : vector<8xf32> to vector<8x1xf32>
    %cst_5 = arith.constant 0.000000e+00 : f32
    %19 = vector.shape_cast %16 : vector<1x128xi1> to vector<1x128xi1>
    %20 = vector.broadcast %19 : vector<1x128xi1> to vector<8x128xi1>
    %21 = vector.broadcast %cst_5 : f32 to vector<8x128xf32>
    %22 = arith.select %20, %10, %21 : vector<8x128xi1>, vector<8x128xf32>
    %cst_6 = arith.constant dense<0.000000e+00> : vector<8xf32>
    %23 = vector.multi_reduction <add>, %22, %cst_6 [1] : vector<8x128xf32> to vector<8xf32>
    %24 = vector.shape_cast %23 : vector<8xf32> to vector<8x1xf32>
    %25 = arith.subf %18, %24 : vector<8x1xf32>
    %cst_7 = arith.constant 9.99999993E-9 : f32
    %26 = vector.broadcast %cst_7 : f32 to vector<8x1xf32>
    %27 = arith.addf %18, %26 : vector<8x1xf32>
    %28 = tpu.reciprocal %27 {approx = true} : vector<8x1xf32> -> vector<8x1xf32>
    %29 = arith.mulf %25, %28 : vector<8x1xf32>
    %cst_8 = arith.constant 0xFF800000 : f32
    %30 = vector.shape_cast %16 : vector<1x128xi1> to vector<1x128xi1>
    %31 = vector.broadcast %30 : vector<1x128xi1> to vector<8x128xi1>
    %32 = vector.broadcast %cst_8 : f32 to vector<8x128xf32>
    %33 = arith.select %31, %10, %32 : vector<8x128xi1>, vector<8x128xf32>
    %cst_9 = arith.constant dense<0xFF800000> : vector<8xf32>
    %34 = vector.multi_reduction <maximumf>, %33, %cst_9 [1] : vector<8x128xf32> to vector<8xf32>
    %35 = vector.shape_cast %34 : vector<8xf32> to vector<8x1xf32>
    %36 = vector.broadcast %35 : vector<8x1xf32> to vector<8x128xf32>
    %37 = arith.cmpf oge, %33, %36 : vector<8x128xf32>
    %c128_i32 = arith.constant 128 : i32
    %38 = vector.shape_cast %11 : vector<1x128xi32> to vector<1x128xi32>
    %39 = vector.broadcast %38 : vector<1x128xi32> to vector<8x128xi32>
    %40 = vector.broadcast %c128_i32 : i32 to vector<8x128xi32>
    %41 = arith.select %37, %39, %40 : vector<8x128xi1>, vector<8x128xi32>
    %cst_10 = arith.constant dense<2147483647> : vector<8xi32>
    %42 = vector.multi_reduction <minsi>, %41, %cst_10 [1] : vector<8x128xi32> to vector<8xi32>
    %43 = vector.shape_cast %42 : vector<8xi32> to vector<8x1xi32>
    %c1_i32 = arith.constant 1 : i32
    %44 = vector.broadcast %c1_i32 : i32 to vector<8x1xi32>
    %45 = arith.subi %43, %44 : vector<8x1xi32>
    %c3_i32_11 = arith.constant 3 : i32
    %46 = vector.broadcast %c3_i32_11 : i32 to vector<8x1xi32>
    %47 = arith.maxsi %45, %46 : vector<8x1xi32>
    %c1_i32_12 = arith.constant 1 : i32
    %48 = vector.broadcast %c1_i32_12 : i32 to vector<8x1xi32>
    %49 = arith.addi %43, %48 : vector<8x1xi32>
    %c13_i32_13 = arith.constant 13 : i32
    %50 = vector.broadcast %c13_i32_13 : i32 to vector<8x1xi32>
    %51 = arith.minsi %49, %50 : vector<8x1xi32>
    %52 = vector.broadcast %11 : vector<1x128xi32> to vector<8x128xi32>
    %53 = vector.broadcast %47 : vector<8x1xi32> to vector<8x128xi32>
    %54 = arith.cmpi sge, %52, %53 : vector<8x128xi32>
    %55 = vector.broadcast %11 : vector<1x128xi32> to vector<8x128xi32>
    %56 = vector.broadcast %51 : vector<8x1xi32> to vector<8x128xi32>
    %57 = arith.cmpi slt, %55, %56 : vector<8x128xi32>
    %58 = arith.andi %54, %57 : vector<8x128xi1>
    %cst_14 = arith.constant 0.000000e+00 : f32
    %59 = vector.broadcast %cst_14 : f32 to vector<8x128xf32>
    %60 = arith.select %58, %10, %59 : vector<8x128xi1>, vector<8x128xf32>
    %cst_15 = arith.constant dense<0.000000e+00> : vector<8xf32>
    %61 = vector.multi_reduction <add>, %60, %cst_15 [1] : vector<8x128xf32> to vector<8xf32>
    %62 = vector.shape_cast %61 : vector<8xf32> to vector<8x1xf32>
    %63 = arith.subf %24, %62 : vector<8x1xf32>
    %cst_16 = arith.constant 1.000000e-07 : f32
    %64 = vector.broadcast %cst_16 : f32 to vector<8x1xf32>
    %65 = arith.addf %24, %64 : vector<8x1xf32>
    %66 = tpu.reciprocal %65 {approx = true} : vector<8x1xf32> -> vector<8x1xf32>
    %67 = arith.mulf %63, %66 : vector<8x1xf32>
    %c0_17 = arith.constant 0 : index
    %c0_18 = arith.constant 0 : index
    %c0_19 = arith.constant 0 : index
    %68 = vector.load %arg4[%c0_17, %c0_18, %c0_19] : memref<1x1x128xf32, #tpu.memory_space<vmem>>, vector<1x1x128xf32>
    %cst_20 = arith.constant dense<0.000000e+00> : vector<128xf32>
    %69 = vector.multi_reduction <add>, %10, %cst_20 [0] : vector<8x128xf32> to vector<128xf32>
    %70 = vector.shape_cast %69 : vector<128xf32> to vector<1x128xf32>
    %71 = vector.shape_cast %70 : vector<1x128xf32> to vector<1x1x128xf32>
    %72 = arith.addf %68, %71 : vector<1x1x128xf32>
    %c0_21 = arith.constant 0 : index
    %c0_22 = arith.constant 0 : index
    %c0_23 = arith.constant 0 : index
    %73 = vector.load %arg4[%c0_21, %c0_22, %c0_23] : memref<1x1x128xf32, #tpu.memory_space<vmem>>, vector<1x1x128xf32>
    tpu.vector_store %arg4[%c0_21, %c0_22, %c0_23], %72 {strides = array<i32>} : memref<1x1x128xf32, #tpu.memory_space<vmem>>, vector<1x1x128xf32>,
    %c0_24 = arith.constant 0 : index
    %c0_25 = arith.constant 0 : index
    %c0_26 = arith.constant 0 : index
    %74 = vector.load %arg5[%c0_24, %c0_25, %c0_26] : memref<1x1x128xf32, #tpu.memory_space<vmem>>, vector<1x1x128xf32>
    %75 = vector.shape_cast %29 : vector<8x1xf32> to vector<1x8x1xf32>
    %cst_27 = arith.constant dense<0.000000e+00> : vector<1xf32>
    %76 = vector.multi_reduction <add>, %75, %cst_27 [1, 2] : vector<1x8x1xf32> to vector<1xf32>
    %77 = vector.shape_cast %76 : vector<1xf32> to vector<1x1x1xf32>
    %78 = vector.extract %77[0, 0, 0] : f32 from vector<1x1x1xf32>
    %79 = vector.broadcast %78 : f32 to vector<1x1xf32>
    %80 = vector.shape_cast %79 : vector<1x1xf32> to vector<1x1x1xf32>
    %81 = vector.broadcast %80 : vector<1x1x1xf32> to vector<1x1x128xf32>
    %82 = arith.addf %74, %81 : vector<1x1x128xf32>
    %c0_28 = arith.constant 0 : index
    %c0_29 = arith.constant 0 : index
    %c0_30 = arith.constant 0 : index
    %83 = vector.load %arg5[%c0_28, %c0_29, %c0_30] : memref<1x1x128xf32, #tpu.memory_space<vmem>>, vector<1x1x128xf32>
    tpu.vector_store %arg5[%c0_28, %c0_29, %c0_30], %82 {strides = array<i32>} : memref<1x1x128xf32, #tpu.memory_space<vmem>>, vector<1x1x128xf32>,
    %c0_31 = arith.constant 0 : index
    %c0_32 = arith.constant 0 : index
    %c0_33 = arith.constant 0 : index
    %84 = vector.load %arg6[%c0_31, %c0_32, %c0_33] : memref<1x1x128xf32, #tpu.memory_space<vmem>>, vector<1x1x128xf32>
    %85 = vector.shape_cast %67 : vector<8x1xf32> to vector<1x8x1xf32>
    %cst_34 = arith.constant dense<0.000000e+00> : vector<1xf32>
    %86 = vector.multi_reduction <add>, %85, %cst_34 [1, 2] : vector<1x8x1xf32> to vector<1xf32>
    %87 = vector.shape_cast %86 : vector<1xf32> to vector<1x1x1xf32>
    %88 = vector.extract %87[0, 0, 0] : f32 from vector<1x1x1xf32>
    %89 = vector.broadcast %88 : f32 to vector<1x1xf32>
    %90 = vector.shape_cast %89 : vector<1x1xf32> to vector<1x1x1xf32>
    %91 = vector.broadcast %90 : vector<1x1x1xf32> to vector<1x1x128xf32>
    %92 = arith.addf %84, %91 : vector<1x1x128xf32>
    %c0_35 = arith.constant 0 : index
    %c0_36 = arith.constant 0 : index
    %c0_37 = arith.constant 0 : index
    %93 = vector.load %arg6[%c0_35, %c0_36, %c0_37] : memref<1x1x128xf32, #tpu.memory_space<vmem>>, vector<1x1x128xf32>
    tpu.vector_store %arg6[%c0_35, %c0_36, %c0_37], %92 {strides = array<i32>} : memref<1x1x128xf32, #tpu.memory_space<vmem>>, vector<1x1x128xf32>,
    return
  }
  func.func @transform_0(%arg0: i32, %arg1: i32) -> (i32, i32) {
    %c1_i32 = arith.constant 1 : i32
    %0 = arith.muli %arg0, %c1_i32 : i32
    %1 = arith.addi %0, %arg1 : i32
    %c0_i32 = arith.constant 0 : i32
    %c0_i32_0 = arith.constant 0 : i32
    return %1, %c0_i32 : i32, i32
  }
  func.func @transform_1(%arg0: i32, %arg1: i32) -> (i32, i32) {
    %c0_i32 = arith.constant 0 : i32
    %c0_i32_0 = arith.constant 0 : i32
    %c0_i32_1 = arith.constant 0 : i32
    return %c0_i32, %c0_i32_0 : i32, i32
  }
  func.func @transform_2(%arg0: i32, %arg1: i32) -> (i32, i32, i32) {
    %c0_i32 = arith.constant 0 : i32
    %c0_i32_0 = arith.constant 0 : i32
    %c0_i32_1 = arith.constant 0 : i32
    return %arg0, %c0_i32, %c0_i32_0 : i32, i32, i32
  }
  func.func @transform_3(%arg0: i32, %arg1: i32) -> (i32, i32, i32) {
    %c0_i32 = arith.constant 0 : i32
    %c0_i32_0 = arith.constant 0 : i32
    %c0_i32_1 = arith.constant 0 : i32
    return %arg0, %c0_i32, %c0_i32_0 : i32, i32, i32
  }
  func.func @transform_4(%arg0: i32, %arg1: i32) -> (i32, i32, i32) {
    %c0_i32 = arith.constant 0 : i32
    %c0_i32_0 = arith.constant 0 : i32
    %c0_i32_1 = arith.constant 0 : i32
    return %arg0, %c0_i32, %c0_i32_0 : i32, i32, i32
  }
}

</mosaic_0001>

<llo_original>
// kernel: tpu_custom_call.1
$region0: #{tpu_custom_call.1}
  #allocation0 [shape = 'u32[]', space=smem, size = 0x4, offset = 0x4, fixed_abs, tag = 'smem constant byte address 0x4 - core index']
  #allocation1 [shape = 'u32[144,128]{1,0:T(1,128)}', space=vmem, size = 0x12000, scoped, tag = 'internal scratch']
  %s0 = inlined_call_operand.hbm [shape: f32[8,64], index: 0, kind: input, shape index: {}]
  %s1 = inlined_call_operand.hbm [shape: f32[64,256], index: 1, kind: input, shape index: {}]
  %s2 = inlined_call_operand.hbm [shape: f32[1,1,128], index: 2, kind: output, shape index: {0}]
  %s3 = inlined_call_operand.hbm [shape: f32[1,1,128], index: 3, kind: output, shape index: {1}]
  %s4 = inlined_call_operand.hbm [shape: f32[1,1,128], index: 4, kind: output, shape index: {2}]
  %5 = xla_tuple %s2, %s3, %s4
  %s6 = sld [smem:[#allocation0]]
  $region46: #{tpu_custom_call.1} parent=0
    _
  %s8 = ssub.s32 1, %s6
  %s9 = scalar_select 0, %s8, %s6
  $region1: #{tpu_custom_call.1} parent=0
    #allocation2 [shape = 'u8[4096]{0}', space=vmem, size = 0x1000, scoped, tag = 'input window, operand 0, single buffered']
    #allocation3 [shape = 's32[1]{0}', space=sflag, size = 0x4, scoped, tag = 'scoped memory for tpu_custom_call.1']
    #allocation4 [shape = 's32[1]{0}', space=sflag, size = 0x4, scoped, tag = 'scoped memory for tpu_custom_call.1']
    #allocation5 [shape = 'u8[65536]{0}', space=vmem, size = 0x10000, scoped, tag = 'input window, operand 1, single buffered']
    #allocation6 [shape = 's32[1]{0}', space=sflag, size = 0x4, scoped, tag = 'scoped memory for tpu_custom_call.1']
    #allocation7 [shape = 'u8[512]{0}', space=vmem, size = 0x400, scoped, tag = 'output window, operand 0, single buffered']
    #allocation8 [shape = 'u8[512]{0}', space=vmem, size = 0x400, scoped, tag = 'output window, operand 1, single buffered']
    #allocation9 [shape = 's32[1]{0}', space=sflag, size = 0x4, scoped, tag = 'scoped memory for tpu_custom_call.1']
    #allocation10 [shape = 'u8[512]{0}', space=vmem, size = 0x400, scoped, tag = 'output window, operand 2, single buffered']
    %10 = vsyncpa [#allocation3], 0
    %11 = vsyncpa [#allocation6], 0
    %12 = vsyncpa [#allocation4], 0
    %13 = vsyncpa [#allocation9], 0
    // Predicated region
    $region2: #{tpu_custom_call.1} parent=1 // pred_check
      _
    $region3: #{tpu_custom_call.1} parent=1 // pred_check_branch
      %15 = sbr.rel (0) target = $region5
    $region4: #{tpu_custom_call.1} parent=1 // pred_region
      %s16 = sadd.s32 0, 0
      %s18 = ssub.s32 128, 128
      %19 = vsyncadd [#allocation3], %s18
      %s20 = smul.addr %s16, 128
      %s21 = scalar_lea.hbm %s0, %s20
      %s23 = sshll.u32 [#allocation2], 4
      %s24 = int_to_ptr.vmem [resolvable:$true] %s23
      %26 = dma.hbm_to_vmem [thread:$0]  %s21, 128, %s24, [#allocation3]
    $region5: #{tpu_custom_call.1} parent=1 // pred_fallthru
      _
    // Predicated region
    $region6: #{tpu_custom_call.1} parent=1 // pred_check
      _
    $region7: #{tpu_custom_call.1} parent=1 // pred_check_branch
      %28 = sbr.rel (0) target = $region9
    $region8: #{tpu_custom_call.1} parent=1 // pred_region
      %s30 = ssub.s32 2048, 2048
      %31 = vsyncadd [#allocation6], %s30
      %s32 = sshll.u32 [#allocation5], 4
      %s33 = int_to_ptr.vmem [resolvable:$true] %s32
      %38 = dma.hbm_to_vmem [thread:$0]  %s1, 2048, %s33, [#allocation6], 256, 256, 16
    $region9: #{tpu_custom_call.1} parent=1 // pred_fallthru
      _
    // Predicated region
    $region10: #{tpu_custom_call.1} parent=1 // pred_check
      _
    $region11: #{tpu_custom_call.1} parent=1 // pred_check_branch
      %40 = sbr.rel (0) target = $region13
    $region12: #{tpu_custom_call.1} parent=1 // pred_region
      %41 = dma.done [#allocation3], 128
    $region13: #{tpu_custom_call.1} parent=1 // pred_fallthru
      _
    // Predicated region
    $region14: #{tpu_custom_call.1} parent=1 // pred_check
      _
    $region15: #{tpu_custom_call.1} parent=1 // pred_check_branch
      %43 = sbr.rel (0) target = $region17
    $region16: #{tpu_custom_call.1} parent=1 // pred_region
      %44 = dma.done [#allocation6], 2048
    $region17: #{tpu_custom_call.1} parent=1 // pred_fallthru
      _
    %s45 = sadd.s32 0, 0
    %p46 = scmp.eq.s32.totalorder 0, 0
    // Predicated region
    $region18: #{tpu_custom_call.1} parent=1 // pred_check
      %p47 = pneg %p46
    $region19: #{tpu_custom_call.1} parent=1 // pred_check_branch
      %49 = sbr.rel (%p47) target = $region21
    $region20: #{tpu_custom_call.1} parent=1 // pred_region
      %50 = vst [vmem:[#allocation7] sm:$0x1] 0.0
      %51 = vst [vmem:[#allocation8] sm:$0x1] 0.0
      %52 = vst [vmem:[#allocation10] sm:$0x1] 0.0
    $region21: #{tpu_custom_call.1} parent=1 // pred_fallthru
      _
    %v53 = vld [vmem:[#allocation2] sm:$0xff]
    %v54 = vld [vmem:[#allocation5] sm:$0xff]
    %v55 = vld [vmem:[#allocation5 + $0x8] sm:$0xff]
    %v56 = vld [vmem:[#allocation5 + $0x10] sm:$0xff]
    %v57 = vld [vmem:[#allocation5 + $0x18] sm:$0xff]
    %v58 = vld [vmem:[#allocation5 + $0x20] sm:$0xff]
    %v59 = vld [vmem:[#allocation5 + $0x28] sm:$0xff]
    %v60 = vld [vmem:[#allocation5 + $0x30] sm:$0xff]
    %v61 = vld [vmem:[#allocation5 + $0x38] sm:$0xff]
    %v62 = vld [vmem:[#allocation5 + $0x40] sm:$0xff]
    %v63 = vld [vmem:[#allocation5 + $0x48] sm:$0xff]
    %v64 = vld [vmem:[#allocation5 + $0x50] sm:$0xff]
    %v65 = vld [vmem:[#allocation5 + $0x58] sm:$0xff]
    %v66 = vld [vmem:[#allocation5 + $0x60] sm:$0xff]
    %v67 = vld [vmem:[#allocation5 + $0x68] sm:$0xff]
    %v68 = vld [vmem:[#allocation5 + $0x70] sm:$0xff]
    %v69 = vld [vmem:[#allocation5 + $0x78] sm:$0xff]
    %vm70 = vcmask 523264
    %v72 = vsel %vm70, %v53, 0
    %74 = vmatprep.subr.mxu0 0.0
    %75 = vmatpush1.msra.mxu0 0.0
    %76 = vmatprep.subr.mxu0 0.0
    %77 = vmatpush1.msra.mxu0 0.0
    %78 = vmatprep.subr.mxu0 0.0
    %79 = vmatpush1.msra.mxu0 0.0
    %80 = vmatprep.subr.mxu0 0.0
    %81 = vmatpush1.msra.mxu0 0.0
    %82 = vmatprep.subr.mxu0 0.0
    %83 = vmatpush1.msra.mxu0 0.0
    %84 = vmatprep.subr.mxu0 0.0
    %85 = vmatpush1.msra.mxu0 0.0
    %86 = vmatprep.subr.mxu0 0.0
    %87 = vmatpush1.msra.mxu0 0.0
    %88 = vmatprep.subr.mxu0 0.0
    %89 = vmatpush1.msra.mxu0 0.0
    %90 = vmatprep.subr.mxu0 %v69
    %91 = vmatpush1.msra.mxu0 %v68
    %92 = vmatprep.subr.mxu0 %v67
    %93 = vmatpush1.msra.mxu0 %v66
    %94 = vmatprep.subr.mxu0 %v65
    %95 = vmatpush1.msra.mxu0 %v64
    %96 = vmatprep.subr.mxu0 %v63
    %97 = vmatpush1.msra.mxu0 %v62
    %98 = vmatprep.subr.mxu0 %v61
    %99 = vmatpush1.msra.mxu0 %v60
    %100 = vmatprep.subr.mxu0 %v59
    %101 = vmatpush1.msra.mxu0 %v58
    %102 = vmatprep.subr.mxu0 %v57
    %103 = vmatpush1.msra.mxu0 %v56
    %104 = vmatprep.subr.mxu0 %v55
    %105 = vmatpush1.msra.mxu0 %v54
    %106 = vmatprep.subr.mxu0 0.0
    %107 = vmatpush2.msra.mxu0 0.0
    %108 = vmatprep.subr.mxu0 0.0
    %109 = vmatpush2.msra.mxu0 0.0
    %110 = vmatprep.subr.mxu0 0.0
    %111 = vmatpush2.msra.mxu0 0.0
    %112 = vmatprep.subr.mxu0 0.0
    %113 = vmatpush2.msra.mxu0 0.0
    %114 = vmatprep.subr.mxu0 0.0
    %115 = vmatpush2.msra.mxu0 0.0
    %116 = vmatprep.subr.mxu0 0.0
    %117 = vmatpush2.msra.mxu0 0.0
    %118 = vmatprep.subr.mxu0 0.0
    %119 = vmatpush2.msra.mxu0 0.0
    %120 = vmatprep.subr.mxu0 0.0
    %121 = vmatpush2.msra.mxu0 0.0
    %122 = vmatprep.subr.mxu0 0.0
    %123 = vmatpush2.msra.mxu0 0.0
    %124 = vmatprep.subr.mxu0 0.0
    %125 = vmatpush2.msra.mxu0 0.0
    %126 = vmatprep.subr.mxu0 0.0
    %127 = vmatpush2.msra.mxu0 0.0
    %128 = vmatprep.subr.mxu0 0.0
    %129 = vmatpush2.msra.mxu0 0.0
    %130 = vmatprep.subr.mxu0 0.0
    %131 = vmatpush2.msra.mxu0 0.0
    %132 = vmatprep.subr.mxu0 0.0
    %133 = vmatpush2.msra.mxu0 0.0
    %134 = vmatprep.subr.mxu0 0.0
    %135 = vmatpush2.msra.mxu0 0.0
    %136 = vmatprep.subr.mxu0 0.0
    %137 = vmatpush2.msra.mxu0 0.0
    %138 = vmatprep.mubr.f32.mxu0 0.0
    %139 = vmatmul.mubr.f32.gmra.mxu0 %v72
    %v140 = vpop.f32.mrf.mxu0
    %v141 = vadd.f32 0.0, %v140
    %v142 = vpop.f32.mrf.mxu0
    %v143 = vadd.f32 0.0, %v142
    %144 = vdwg.mxu0
    %v145 = vmul.f32 %v141, %v141
    %v146 = vmul.f32 %v143, %v143
    %v147 = vadd.f32 %v145, %v146
    %v148 = vlaneseq
    %v149 = vand.u32 %v148, 127
    %vm150 = vcmp.ge.s32.totalorder %v149, 3
    %vm151 = vcmp.lt.s32.totalorder %v149, 13
    %vm152 = vmand %vm150, %vm151
    %153 = vadd.xlane.f32.xlu0 %v147
    %v154 = vpop.xlane.xlu0 %153
    %v155 = vsel %vm152, 1, 0
    %vm156 = vcmp.eq.s32.totalorder %v155, 1
    %v157 = vsel %vm156, %v147, 0.0
    %158 = vadd.xlane.f32.xlu0 %v157
    %v159 = vpop.xlane.xlu0 %158
    %v160 = vsub.f32 %v154, %v159
    %v161 = vadd.f32 %v154, 1e-08
    %v162 = vrcp.pop %v161
    %v163 = vmul.f32 %v160, %v162
    %v164 = vsel %vm156, %v147, -inf
    %165 = vmax.xlane.f32.xlu0 %v164
    %v166 = vpop.xlane.xlu0 %165
    %vm167 = vcmp.ge.f32.partialorder %v164, %v166
    %v168 = vsel %vm167, %v149, 128
    %v169 = vand.u32 %v168, 65535
    %v170 = vshra.s32 %v168, 16
    %v171 = vcvt.s32.f32 %v169
    %v172 = vcvt.s32.f32 %v170
    %173 = vmin.xlane.f32.xlu0 %v172
    %v174 = vpop.xlane.xlu0 %173
    %vm175 = vcmp.eq.f32.partialorder %v172, %v174
    %v176 = vsel %vm175, %v171, inf
    %177 = vmin.xlane.f32.xlu0 %v176
    %v178 = vpop.xlane.xlu0 %177
    %v179 = vcvt.f32.s32 %v178
    %v180 = vcvt.f32.s32 %v174
    %v181 = vshll.u32 %v180, 16
    %v182 = vadd.s32 %v181, %v179
    %v183 = vsub.s32 %v182, 1
    %vm184 = vcmp.gt.s32.totalorder %v183, 3
    %v185 = vsel %vm184, %v183, 3
    %v186 = vadd.s32 %v182, 1
    %vm187 = vcmp.lt.s32.totalorder %v186, 13
    %v188 = vsel %vm187, %v186, 13
    %vm189 = vcmp.ge.s32.totalorder %v149, %v185
    %vm190 = vcmp.lt.s32.totalorder %v149, %v188
    %vm191 = vmand %vm189, %vm190
    %v192 = vsel %vm191, %v147, 0.0
    %193 = vadd.xlane.f32.xlu0 %v192
    %v194 = vpop.xlane.xlu0 %193
    %v195 = vsub.f32 %v159, %v194
    %v196 = vadd.f32 %v159, 1e-07
    %v197 = vrcp.pop %v196
    %v198 = vmul.f32 %v195, %v197
    %v199 = vld [vmem:[#allocation7] sm:$0x1]
    %v200 = vrot.slane %v147, 4
    %v201 = vadd.f32 %v147, %v200
    %v202 = vrot.slane %v201, 2
    %v203 = vadd.f32 %v201, %v202
    %v204 = vrot.slane %v203, 1
    %v205 = vadd.f32 %v203, %v204
    %v206 = vadd.f32 %v199, %v205
    %207 = vst [vmem:[#allocation7] sm:$0x1] %v206
    %v208 = vld [vmem:[#allocation8] sm:$0x1]
    %vm209 = vcmask 7168
    %v210 = vsel %vm209, %v163, 0.0
    %211 = vadd.xlane.f32.xlu0 %v210
    %v212 = vpop.xlane.xlu0 %211
    %v213 = vrot.slane %v212, 4
    %v214 = vadd.f32 %v212, %v213
    %v215 = vrot.slane %v214, 2
    %v216 = vadd.f32 %v214, %v215
    %v217 = vrot.slane %v216, 1
    %v218 = vadd.f32 %v216, %v217
    %s219 = vtos %v218
    %v220 = vstv %s219
    %v221 = vadd.f32 %v208, %v220
    %222 = vst [vmem:[#allocation8] sm:$0x1] %v221
    %v223 = vld [vmem:[#allocation10] sm:$0x1]
    %v224 = vsel %vm209, %v198, 0.0
    %225 = vadd.xlane.f32.xlu0 %v224
    %v226 = vpop.xlane.xlu0 %225
    %v227 = vrot.slane %v226, 4
    %v228 = vadd.f32 %v226, %v227
    %v229 = vrot.slane %v228, 2
    %v230 = vadd.f32 %v228, %v229
    %v231 = vrot.slane %v230, 1
    %v232 = vadd.f32 %v230, %v231
    %s233 = vtos %v232
    %v234 = vstv %s233
    %v235 = vadd.f32 %v223, %v234
    %236 = vst [vmem:[#allocation10] sm:$0x1] %v235
    // Predicated region
    $region22: #{tpu_custom_call.1} parent=1 // pred_check
      _
    $region23: #{tpu_custom_call.1} parent=1 // pred_check_branch
      %238 = sbr.rel (0) target = $region25
    $region24: #{tpu_custom_call.1} parent=1 // pred_region
      %s240 = ssub.s32 16, 16
      %241 = vsyncadd [#allocation4], %s240
      %s243 = sshll.u32 [#allocation7], 4
      %s244 = int_to_ptr.vmem [resolvable:$true] %s243
      %246 = dma.vmem_to_hbm [thread:$0]  %s244, 16, %s2, [#allocation4]
    $region25: #{tpu_custom_call.1} parent=1 // pred_fallthru
      _
    // Predicated region
    $region26: #{tpu_custom_call.1} parent=1 // pred_check
      _
    $region27: #{tpu_custom_call.1} parent=1 // pred_check_branch
      %248 = sbr.rel (0) target = $region29
    $region28: #{tpu_custom_call.1} parent=1 // pred_region
      %s250 = ssub.s32 16, 16
      %251 = vsyncadd [#allocation9], %s250
      %s253 = sshll.u32 [#allocation8], 4
      %s254 = int_to_ptr.vmem [resolvable:$true] %s253
      %256 = dma.vmem_to_hbm [thread:$0]  %s254, 16, %s3, [#allocation9]
    $region29: #{tpu_custom_call.1} parent=1 // pred_fallthru
      _
    // Predicated region
    $region30: #{tpu_custom_call.1} parent=1 // pred_check
      _
    $region31: #{tpu_custom_call.1} parent=1 // pred_check_branch
      %258 = sbr.rel (0) target = $region33
    $region32: #{tpu_custom_call.1} parent=1 // pred_region
      %s260 = ssub.s32 16, 16
      %261 = vsyncadd [#allocation9], %s260
      %s263 = sshll.u32 [#allocation10], 4
      %s264 = int_to_ptr.vmem [resolvable:$true] %s263
      %266 = dma.vmem_to_hbm [thread:$0]  %s264, 16, %s4, [#allocation9]
    $region33: #{tpu_custom_call.1} parent=1 // pred_fallthru
      _
    // Predicated region
    $region34: #{tpu_custom_call.1} parent=1 // pred_check
      _
    $region35: #{tpu_custom_call.1} parent=1 // pred_check_branch
      %268 = sbr.rel (0) target = $region37
    $region36: #{tpu_custom_call.1} parent=1 // pred_region
      %269 = dma.done [#allocation4], 16
    $region37: #{tpu_custom_call.1} parent=1 // pred_fallthru
      _
    // Predicated region
    $region38: #{tpu_custom_call.1} parent=1 // pred_check
      _
    $region39: #{tpu_custom_call.1} parent=1 // pred_check_branch
      %271 = sbr.rel (0) target = $region41
    $region40: #{tpu_custom_call.1} parent=1 // pred_region
      %272 = dma.done [#allocation9], 16
    $region41: #{tpu_custom_call.1} parent=1 // pred_fallthru
      _
    // Predicated region
    $region42: #{tpu_custom_call.1} parent=1 // pred_check
      _
    $region43: #{tpu_custom_call.1} parent=1 // pred_check_branch
      %274 = sbr.rel (0) target = $region45
    $region44: #{tpu_custom_call.1} parent=1 // pred_region
      %275 = dma.done [#allocation9], 16
    $region45: #{tpu_custom_call.1} parent=1 // pred_fallthru
      _
    %276 = vsyncpa [#allocation3], 1
    %277 = vsyncpa [#allocation6], 1
    %278 = vsyncpa [#allocation4], 1
    %279 = vsyncpa [#allocation9], 1

</llo_original>
